<compile_context>
chip_gen: v7x
topology: tpu7x:2x2x1
jax: 0.10.0
libtpu: 0.0.40
codegen_flags: <defaults>
</compile_context>

<pallas_src>
import jax
import jax.numpy as jnp
from jax.experimental import pallas as pl
from jax.experimental.pallas import tpu as pltpu

OUT_SIZE = 1
TIME_SEQ = 10
C_IN = 2
C_OUT = 2
KSIZE = 2
L_OUT = TIME_SEQ - KSIZE + 1   # 9
FLAT = C_OUT * L_OUT           # 18
FEAT = C_IN * TIME_SEQ         # 20
LANE = 128


def _round_up(n, m):
    return ((n + m - 1) // m) * m


def caunet_kernel(xt_ref, lwt_ref, cw_ref, cb_ref, lb_ref, o_ref):
    # xt_ref:  (FEAT, TB) VMEM  -- rows 0..9 = channel 0, rows 10..19 = channel 1
    # lwt_ref: (L_OUT, C_OUT) VMEM -- linear weight, transposed (t on sublanes)
    # cw_ref:  (8,)  SMEM        -- conv weight flat [o, i, k]
    # cb_ref:  (2,)  SMEM        -- conv bias
    # lb_ref:  (1,)  SMEM        -- linear bias
    # o_ref:   (1, TB) VMEM      -- lane-dense output slab
    xt = xt_ref[...]

    # Shifted sublane views for the kernel_size=2 valid conv.
    x0l = xt[0:L_OUT, :]                          # (9, TB) channel 0, t
    x0r = xt[1:TIME_SEQ, :]                       # (9, TB) channel 0, t+1
    x1l = xt[TIME_SEQ:TIME_SEQ + L_OUT, :]        # (9, TB) channel 1, t
    x1r = xt[TIME_SEQ + 1:FEAT, :]                # (9, TB) channel 1, t+1

    lwt = lwt_ref[...]                            # (9, 2)
    lw0 = lwt[:, 0:1]                             # (9, 1) -> lane-broadcast
    lw1 = lwt[:, 1:2]                             # (9, 1)

    conv0 = (cw_ref[0] * x0l + cw_ref[1] * x0r
             + cw_ref[2] * x1l + cw_ref[3] * x1r + cb_ref[0])
    conv1 = (cw_ref[4] * x0l + cw_ref[5] * x0r
             + cw_ref[6] * x1l + cw_ref[7] * x1r + cb_ref[1])

    # ReLU, fold into the final linear; acc initialized from the o=0 term
    # (no zeros_like materialize) with the lw columns hoisted above.
    acc = jnp.maximum(conv0, 0.0) * lw0
    acc = acc + jnp.maximum(conv1, 0.0) * lw1     # (9, TB)

    # Reduce over (o, t): o already folded above, t is a 9-row sublane reduce (XLU).
    o_ref[...] = jnp.sum(acc, axis=0, keepdims=True) + lb_ref[0]


def caunet_forward_pallas(x, conv_w, conv_b, lin_w, lin_b, *, max_block_b=8192):
    """x: (B, 2, TIME_SEQ) float32 (NCL, like PyTorch). Returns (B, 1)."""
    B = x.shape[0]

    # Single contiguous slab; batch on lanes, feature (channel-major time) on sublanes.
    xt = x.reshape(B, FEAT).T                        # (20, B)
    lwt = lin_w.reshape(C_OUT, L_OUT).T              # (9, 2) channel-major flatten order
    cw_flat = conv_w.reshape(-1)                     # (8,) [o, i, k]

    # Batch tiling: TB multiple of 128 lanes, capped so double-buffered blocks
    # stay tiny even under v7x's smaller scoped-VMEM budget.
    tb = min(_round_up(B, LANE), max(_round_up(max_block_b, LANE), LANE))
    b_pad = _round_up(B, tb)
    if b_pad != B:
        xt = jnp.pad(xt, ((0, 0), (0, b_pad - B)))
    num_blocks = b_pad // tb

    grid_spec = pltpu.PrefetchScalarGridSpec(
        num_scalar_prefetch=0,
        grid=(num_blocks,),
        in_specs=[
            pl.BlockSpec((FEAT, tb), lambda i: (0, i)),          # xt (lane-dense)
            pl.BlockSpec((L_OUT, C_OUT), lambda i: (0, 0)),      # lwt (tiny, resident)
            pl.BlockSpec(memory_space=pltpu.SMEM),               # cw_flat
            pl.BlockSpec(memory_space=pltpu.SMEM),               # conv_b
            pl.BlockSpec(memory_space=pltpu.SMEM),               # lin_b
        ],
        out_specs=pl.BlockSpec((1, tb), lambda i: (0, i)),       # lane-dense output
    )

    out_t = pl.pallas_call(
        caunet_kernel,
        out_shape=jax.ShapeDtypeStruct((1, b_pad), jnp.float32),
        grid_spec=grid_spec,
        compiler_params=pltpu.CompilerParams(
            dimension_semantics=("parallel",)),                  # v7x: 2 TCs split batch
    )(xt, lwt, cw_flat, conv_b, lin_b)

    return out_t[:, :B].T                                        # (B, 1)


def caunet_reference(x, conv_w, conv_b, lin_w, lin_b):
    """Pure-JAX reference matching the PyTorch forward."""
    conv = jax.lax.conv_general_dilated(
        x, conv_w, window_strides=(1,), padding="VALID",
        dimension_numbers=("NCH", "OIH", "NCH"))
    conv = conv + conv_b[None, :, None]
    act = jnp.maximum(conv, 0.0)                     # (B, 2, 9)
    flat = act.reshape(x.shape[0], FLAT)             # PyTorch Flatten (channel-major)
    return flat @ lin_w.T + lin_b[None, :]


def caunet_forward(x, conv_w, conv_b, lin_w, lin_b, *,
                   min_pallas_batch=1024, max_block_b=8192):
    """Dispatcher: below `min_pallas_batch` the fixed pallas_call cost dominates
    this 40-flop-per-row network, so fall back to the fused XLA path."""
    if x.shape[0] < min_pallas_batch:
        return caunet_reference(x, conv_w, conv_b, lin_w, lin_b)
    return caunet_forward_pallas(x, conv_w, conv_b, lin_w, lin_b,
                                 max_block_b=max_block_b)


if __name__ == "__main__":
    key = jax.random.PRNGKey(0)
    k_x, k_cw, k_cb, k_lw, k_lb = jax.random.split(key, 5)

    # Small batch, deliberately not a multiple of 128 so the padding path and a
    # multi-tile grid (max_block_b=128 -> 2 tiles) are both exercised.
    B = 200
    x = jax.random.normal(k_x, (B, C_IN, TIME_SEQ), dtype=jnp.float32)

    # Deterministic synthetic parameters (shapes per nn.Conv1d / nn.Linear).
    conv_w = 0.3 * jax.random.normal(k_cw, (C_OUT, C_IN, KSIZE), dtype=jnp.float32)
    conv_b = 0.1 * jax.random.normal(k_cb, (C_OUT,), dtype=jnp.float32)
    lin_w = 0.2 * jax.random.normal(k_lw, (OUT_SIZE, FLAT), dtype=jnp.float32)
    lin_b = 0.1 * jax.random.normal(k_lb, (OUT_SIZE,), dtype=jnp.float32)

    # Call the Pallas path directly so the kernel itself is what runs here.
    out = caunet_forward_pallas(x, conv_w, conv_b, lin_w, lin_b, max_block_b=128)
    out = jax.block_until_ready(out)

    ref = caunet_reference(x, conv_w, conv_b, lin_w, lin_b)
    assert out.shape == (B, OUT_SIZE), out.shape
    assert jnp.allclose(out, ref, atol=1e-5, rtol=1e-5), (out, ref)

    print("KERNEL_OK")
</pallas_src>

<mosaic_0001>
module attributes {stable_mosaic.version = 11 : i64} {
  func.func @caunet_kernel(%arg0: i32, %arg1: memref<20x128xf32, #tpu.memory_space<vmem>>, %arg2: memref<9x2xf32, #tpu.memory_space<vmem>>, %arg3: memref<8xf32, #tpu.memory_space<smem>>, %arg4: memref<2xf32, #tpu.memory_space<smem>>, %arg5: memref<1xf32, #tpu.memory_space<smem>>, %arg6: memref<1x128xf32, #tpu.memory_space<vmem>>) attributes {dimension_semantics = [#tpu.dimension_semantics<parallel>], iteration_bounds = array<i64: 2>, scalar_prefetch = 0 : i64, scratch_operands = 0 : i64, tpu.core_type = #tpu.core_type<tc>, window_params = [{transform_indices = @transform_0, window_bounds = array<i64: 20, 128>}, {pipeline_mode = #tpu.pipeline_mode<synchronous>, transform_indices = @transform_1, window_bounds = array<i64: 9, 2>}, {transform_indices = @transform_2, window_bounds = array<i64: 8>}, {transform_indices = @transform_3, window_bounds = array<i64: 2>}, {transform_indices = @transform_4, window_bounds = array<i64: 1>}, {transform_indices = @transform_5, window_bounds = array<i64: 1, 128>}]} {
    %c0 = arith.constant 0 : index
    %c0_0 = arith.constant 0 : index
    %0 = vector.load %arg1[%c0, %c0_0] : memref<20x128xf32, #tpu.memory_space<vmem>>, vector<20x128xf32>
    %1 = vector.extract_strided_slice %0 {offsets = [0, 0], sizes = [9, 128], strides = [1, 1]} : vector<20x128xf32> to vector<9x128xf32>
    %2 = vector.extract_strided_slice %0 {offsets = [1, 0], sizes = [9, 128], strides = [1, 1]} : vector<20x128xf32> to vector<9x128xf32>
    %3 = vector.extract_strided_slice %0 {offsets = [10, 0], sizes = [9, 128], strides = [1, 1]} : vector<20x128xf32> to vector<9x128xf32>
    %4 = vector.extract_strided_slice %0 {offsets = [11, 0], sizes = [9, 128], strides = [1, 1]} : vector<20x128xf32> to vector<9x128xf32>
    %c0_1 = arith.constant 0 : index
    %c0_2 = arith.constant 0 : index
    %5 = vector.load %arg2[%c0_1, %c0_2] : memref<9x2xf32, #tpu.memory_space<vmem>>, vector<9x2xf32>
    %6 = vector.extract_strided_slice %5 {offsets = [0, 0], sizes = [9, 1], strides = [1, 1]} : vector<9x2xf32> to vector<9x1xf32>
    %7 = vector.extract_strided_slice %5 {offsets = [0, 1], sizes = [9, 1], strides = [1, 1]} : vector<9x2xf32> to vector<9x1xf32>
    %c0_3 = arith.constant 0 : index
    %8 = memref.load %arg3[%c0_3] : memref<8xf32, #tpu.memory_space<smem>>
    %9 = vector.broadcast %8 : f32 to vector<9x128xf32>
    %10 = arith.mulf %9, %1 : vector<9x128xf32>
    %c1 = arith.constant 1 : index
    %11 = memref.load %arg3[%c1] : memref<8xf32, #tpu.memory_space<smem>>
    %12 = vector.broadcast %11 : f32 to vector<9x128xf32>
    %13 = arith.mulf %12, %2 : vector<9x128xf32>
    %14 = arith.addf %10, %13 : vector<9x128xf32>
    %c2 = arith.constant 2 : index
    %15 = memref.load %arg3[%c2] : memref<8xf32, #tpu.memory_space<smem>>
    %16 = vector.broadcast %15 : f32 to vector<9x128xf32>
    %17 = arith.mulf %16, %3 : vector<9x128xf32>
    %18 = arith.addf %14, %17 : vector<9x128xf32>
    %c3 = arith.constant 3 : index
    %19 = memref.load %arg3[%c3] : memref<8xf32, #tpu.memory_space<smem>>
    %20 = vector.broadcast %19 : f32 to vector<9x128xf32>
    %21 = arith.mulf %20, %4 : vector<9x128xf32>
    %22 = arith.addf %18, %21 : vector<9x128xf32>
    %c0_4 = arith.constant 0 : index
    %23 = memref.load %arg4[%c0_4] : memref<2xf32, #tpu.memory_space<smem>>
    %24 = vector.broadcast %23 : f32 to vector<9x128xf32>
    %25 = arith.addf %22, %24 : vector<9x128xf32>
    %c4 = arith.constant 4 : index
    %26 = memref.load %arg3[%c4] : memref<8xf32, #tpu.memory_space<smem>>
    %27 = vector.broadcast %26 : f32 to vector<9x128xf32>
    %28 = arith.mulf %27, %1 : vector<9x128xf32>
    %c5 = arith.constant 5 : index
    %29 = memref.load %arg3[%c5] : memref<8xf32, #tpu.memory_space<smem>>
    %30 = vector.broadcast %29 : f32 to vector<9x128xf32>
    %31 = arith.mulf %30, %2 : vector<9x128xf32>
    %32 = arith.addf %28, %31 : vector<9x128xf32>
    %c6 = arith.constant 6 : index
    %33 = memref.load %arg3[%c6] : memref<8xf32, #tpu.memory_space<smem>>
    %34 = vector.broadcast %33 : f32 to vector<9x128xf32>
    %35 = arith.mulf %34, %3 : vector<9x128xf32>
    %36 = arith.addf %32, %35 : vector<9x128xf32>
    %c7 = arith.constant 7 : index
    %37 = memref.load %arg3[%c7] : memref<8xf32, #tpu.memory_space<smem>>
    %38 = vector.broadcast %37 : f32 to vector<9x128xf32>
    %39 = arith.mulf %38, %4 : vector<9x128xf32>
    %40 = arith.addf %36, %39 : vector<9x128xf32>
    %c1_5 = arith.constant 1 : index
    %41 = memref.load %arg4[%c1_5] : memref<2xf32, #tpu.memory_space<smem>>
    %42 = vector.broadcast %41 : f32 to vector<9x128xf32>
    %43 = arith.addf %40, %42 : vector<9x128xf32>
    %cst = arith.constant 0.000000e+00 : f32
    %44 = vector.broadcast %cst : f32 to vector<9x128xf32>
    %45 = arith.maximumf %25, %44 : vector<9x128xf32>
    %46 = vector.broadcast %6 : vector<9x1xf32> to vector<9x128xf32>
    %47 = arith.mulf %45, %46 : vector<9x128xf32>
    %cst_6 = arith.constant 0.000000e+00 : f32
    %48 = vector.broadcast %cst_6 : f32 to vector<9x128xf32>
    %49 = arith.maximumf %43, %48 : vector<9x128xf32>
    %50 = vector.broadcast %7 : vector<9x1xf32> to vector<9x128xf32>
    %51 = arith.mulf %49, %50 : vector<9x128xf32>
    %52 = arith.addf %47, %51 : vector<9x128xf32>
    %cst_7 = arith.constant dense<0.000000e+00> : vector<128xf32>
    %53 = vector.multi_reduction <add>, %52, %cst_7 [0] : vector<9x128xf32> to vector<128xf32>
    %54 = vector.shape_cast %53 : vector<128xf32> to vector<1x128xf32>
    %c0_8 = arith.constant 0 : index
    %55 = memref.load %arg5[%c0_8] : memref<1xf32, #tpu.memory_space<smem>>
    %56 = vector.broadcast %55 : f32 to vector<1x128xf32>
    %57 = arith.addf %54, %56 : vector<1x128xf32>
    %c0_9 = arith.constant 0 : index
    %c0_10 = arith.constant 0 : index
    %58 = vector.load %arg6[%c0_9, %c0_10] : memref<1x128xf32, #tpu.memory_space<vmem>>, vector<1x128xf32>
    tpu.vector_store %arg6[%c0_9, %c0_10], %57 {strides = array<i32>} : memref<1x128xf32, #tpu.memory_space<vmem>>, vector<1x128xf32>,
    return
  }
  func.func @transform_0(%arg0: i32) -> (i32, i32) {
    %c0_i32 = arith.constant 0 : i32
    %c0_i32_0 = arith.constant 0 : i32
    return %c0_i32, %arg0 : i32, i32
  }
  func.func @transform_1(%arg0: i32) -> (i32, i32) {
    %c0_i32 = arith.constant 0 : i32
    %c0_i32_0 = arith.constant 0 : i32
    %c0_i32_1 = arith.constant 0 : i32
    return %c0_i32, %c0_i32_0 : i32, i32
  }
  func.func @transform_2(%arg0: i32) -> i32 {
    %c0_i32 = arith.constant 0 : i32
    %c0_i32_0 = arith.constant 0 : i32
    return %c0_i32 : i32
  }
  func.func @transform_3(%arg0: i32) -> i32 {
    %c0_i32 = arith.constant 0 : i32
    %c0_i32_0 = arith.constant 0 : i32
    return %c0_i32 : i32
  }
  func.func @transform_4(%arg0: i32) -> i32 {
    %c0_i32 = arith.constant 0 : i32
    %c0_i32_0 = arith.constant 0 : i32
    return %c0_i32 : i32
  }
  func.func @transform_5(%arg0: i32) -> (i32, i32) {
    %c0_i32 = arith.constant 0 : i32
    %c0_i32_0 = arith.constant 0 : i32
    return %c0_i32, %arg0 : i32, i32
  }
}

</mosaic_0001>

<llo_original>
// kernel: tpu_custom_call.1
$region0: #{tpu_custom_call.1}
  #allocation0 [shape = 'u32[]', space=smem, size = 0x4, offset = 0x4, fixed_abs, tag = 'smem constant byte address 0x4 - core index']
  #allocation1 [shape = 'u32[144,128]{1,0:T(1,128)}', space=vmem, size = 0x12000, scoped, tag = 'internal scratch']
  #allocation2 [shape = 'f32[1]{0:T(128)S(6)}', space=smem, size = 0x200, scoped, tag = 'scoped memory for tpu_custom_call.1']
  %s0 = inlined_call_operand.hbm [shape: f32[20,256], index: 0, kind: input, shape index: {}]
  %s1 = inlined_call_operand.vmem [shape: f32[9,2], index: 1, kind: input, shape index: {}]
  %s2 = inlined_call_operand.vmem [shape: f32[8], index: 2, kind: input, shape index: {}]
  %s3 = inlined_call_operand.vmem [shape: f32[2], index: 3, kind: input, shape index: {}]
  %s4 = inlined_call_operand.<no memory space> [shape: f32[1], index: 4, kind: input, shape index: {}]
  %s5 = inlined_call_operand.hbm [shape: f32[1,256], index: 5, kind: output, shape index: {}]
  %s6 = sld [smem:[#allocation0]]
  $region65: #{tpu_custom_call.1} parent=0
    _
  %s8 = ssub.s32 1, %s6
  %s9 = scalar_select 0, %s8, %s6
  %10 = sst [smem:[#allocation2]] %s4
  $region1: #{tpu_custom_call.1} parent=0
    #allocation3 [shape = 'u8[24576]{0}', space=vmem, size = 0x6000, scoped, tag = 'input window, operand 0']
    #allocation4 [shape = 's32[2]{0}', space=sflag, size = 0x8, scoped, tag = 'scoped memory for tpu_custom_call.1']
    #allocation5 [shape = 's32[2]{0}', space=sflag, size = 0x8, scoped, tag = 'scoped memory for tpu_custom_call.1']
    #allocation6 [shape = 's32[2]{0}', space=sflag, size = 0x8, scoped, tag = 'scoped memory for tpu_custom_call.1']
    #allocation7 [shape = 'u8[512]{0}', space=smem, size = 0x200, scoped, tag = 'input window, operand 2, single buffered']
    #allocation8 [shape = 'u8[512]{0}', space=smem, size = 0x200, scoped, tag = 'input window, operand 3, single buffered']
    #allocation9 [shape = 's32[1]{0}', space=sflag, size = 0x4, scoped, tag = 'scoped memory for tpu_custom_call.1']
    #allocation10 [shape = 'u8[1024]{0}', space=vmem, size = 0x400, scoped, tag = 'output window, operand 0']
    %11 = vsyncpa [#allocation4], 0
    %s12 = scalar_lea.sflag [#allocation4], 1
    %13 = vsyncpa %s12, 0
    %14 = vsyncpa [#allocation6], 0
    %15 = vsyncpa [#allocation9], 0
    %16 = vsyncpa [#allocation5], 0
    %s17 = scalar_lea.sflag [#allocation5], 1
    %18 = vsyncpa %s17, 0
    loop: start=0, step=1, limit=4
    $region2: #{tpu_custom_call.1} parent=1 // loop_pre_header
      _
    $region3: #{tpu_custom_call.1} parent=1 // loop_header
      %s20 = sphi 0, %s24
      %p21 = scmp.ge.s32.totalorder %s20, 4
      %s30 = sphi 0, %s32
      %s33 = sphi 0, %s30
      %s34 = sphi 0, %s33
      %s50 = sphi 0, %s34
      %s54 = sphi 0, %s54
      %s56 = sphi 0, %s54
      %s57 = sphi 0, %s56
      %s71 = sphi 0, %s57
      %s75 = sphi 0, %s75
      %s77 = sphi 0, %s75
      %s78 = sphi 0, %s77
      %s92 = sphi 0, %s78
      %s96 = sphi 0, %s96
      %s98 = sphi 0, %s96
      %s99 = sphi 0, %s98
      %s113 = sphi 0, %s99
      %s117 = sphi 0, %s117
      %s119 = sphi 0, %s117
      %s120 = sphi 0, %s119
      %s134 = sphi 0, %s120
      %s140 = sphi 0, %s142
      %s143 = sphi 0, %s140
      %s144 = sphi 0, %s143
      %s160 = sphi 0, %s144
    $region4: #{tpu_custom_call.1} parent=1 // loop_header_branch
      %23 = sbr.rel (%p21) target = $region8
    $region5: #{tpu_custom_call.1} parent=1 // loop_body
      %s25 = ssub.s32 %s20, 1
      %s26 = ssub.s32 %s20, 2
      %s27 = sadd.s32 %s20, 1
      %s28 = ssub.s32 %s20, %s27
      %p29 = scmp.eq.s32.totalorder %s28, 0
      %s31 = sadd.s32 %s30, 1
      %s32 = scalar_select %p29, %s30, %s31
      %p35 = pneg %p29
      %p36 = scmp.eq.s32.totalorder %s20, 1
      %p37 = por %p35, %p36
      %p38 = scmp.ne.s32.totalorder %s30, %s33
      %p39 = scmp.eq.s32.totalorder %s20, 0
      %p40 = por %p38, %p39
      %p41 = scmp.ne.s32.totalorder %s30, %s33
      %p42 = scmp.eq.s32.totalorder %s25, 1
      %p43 = por %p41, %p42
      %p44 = scmp.ne.s32.totalorder %s33, %s34
      %p45 = scmp.eq.s32.totalorder %s25, 0
      %p46 = por %p44, %p45
      %p47 = scmp.ne.s32.totalorder %s33, %s34
      %p48 = scmp.eq.s32.totalorder %s26, 1
      %p49 = por %p47, %p48
      %p51 = scmp.ne.s32.totalorder %s34, %s50
      %p52 = scmp.eq.s32.totalorder %s26, 0
      %p53 = por %p51, %p52
      %s55 = sadd.s32 %s54, 1
      %p58 = scmp.eq.s32.totalorder %s20, 1
      %p59 = scmp.ne.s32.totalorder %s54, %s56
      %p60 = scmp.eq.s32.totalorder %s20, 0
      %p61 = por %p59, %p60
      %p62 = scmp.ne.s32.totalorder %s54, %s56
      %p63 = scmp.eq.s32.totalorder %s25, 1
      %p64 = por %p62, %p63
      %p65 = scmp.ne.s32.totalorder %s56, %s57
      %p66 = scmp.eq.s32.totalorder %s25, 0
      %p67 = por %p65, %p66
      %p68 = scmp.ne.s32.totalorder %s56, %s57
      %p69 = scmp.eq.s32.totalorder %s26, 1
      %p70 = por %p68, %p69
      %p72 = scmp.ne.s32.totalorder %s57, %s71
      %p73 = scmp.eq.s32.totalorder %s26, 0
      %p74 = por %p72, %p73
      %s76 = sadd.s32 %s75, 1
      %p79 = scmp.eq.s32.totalorder %s20, 1
      %p80 = scmp.ne.s32.totalorder %s75, %s77
      %p81 = scmp.eq.s32.totalorder %s20, 0
      %p82 = por %p80, %p81
      %p83 = scmp.ne.s32.totalorder %s75, %s77
      %p84 = scmp.eq.s32.totalorder %s25, 1
      %p85 = por %p83, %p84
      %p86 = scmp.ne.s32.totalorder %s77, %s78
      %p87 = scmp.eq.s32.totalorder %s25, 0
      %p88 = por %p86, %p87
      %p89 = scmp.ne.s32.totalorder %s77, %s78
      %p90 = scmp.eq.s32.totalorder %s26, 1
      %p91 = por %p89, %p90
      %p93 = scmp.ne.s32.totalorder %s78, %s92
      %p94 = scmp.eq.s32.totalorder %s26, 0
      %p95 = por %p93, %p94
      %s97 = sadd.s32 %s96, 1
      %p100 = scmp.eq.s32.totalorder %s20, 1
      %p101 = scmp.ne.s32.totalorder %s96, %s98
      %p102 = scmp.eq.s32.totalorder %s20, 0
      %p103 = por %p101, %p102
      %p104 = scmp.ne.s32.totalorder %s96, %s98
      %p105 = scmp.eq.s32.totalorder %s25, 1
      %p106 = por %p104, %p105
      %p107 = scmp.ne.s32.totalorder %s98, %s99
      %p108 = scmp.eq.s32.totalorder %s25, 0
      %p109 = por %p107, %p108
      %p110 = scmp.ne.s32.totalorder %s98, %s99
      %p111 = scmp.eq.s32.totalorder %s26, 1
      %p112 = por %p110, %p111
      %p114 = scmp.ne.s32.totalorder %s99, %s113
      %p115 = scmp.eq.s32.totalorder %s26, 0
      %p116 = por %p114, %p115
      %s118 = sadd.s32 %s117, 1
      %p121 = scmp.eq.s32.totalorder %s20, 1
      %p122 = scmp.ne.s32.totalorder %s117, %s119
      %p123 = scmp.eq.s32.totalorder %s20, 0
      %p124 = por %p122, %p123
      %p125 = scmp.ne.s32.totalorder %s117, %s119
      %p126 = scmp.eq.s32.totalorder %s25, 1
      %p127 = por %p125, %p126
      %p128 = scmp.ne.s32.totalorder %s119, %s120
      %p129 = scmp.eq.s32.totalorder %s25, 0
      %p130 = por %p128, %p129
      %p131 = scmp.ne.s32.totalorder %s119, %s120
      %p132 = scmp.eq.s32.totalorder %s26, 1
      %p133 = por %p131, %p132
      %p135 = scmp.ne.s32.totalorder %s120, %s134
      %p136 = scmp.eq.s32.totalorder %s26, 0
      %p137 = por %p135, %p136
      %s138 = ssub.s32 %s20, %s27
      %p139 = scmp.eq.s32.totalorder %s138, 0
      %s141 = sadd.s32 %s140, 1
      %s142 = scalar_select %p139, %s140, %s141
      %p145 = pneg %p139
      %p146 = scmp.eq.s32.totalorder %s20, 1
      %p147 = por %p145, %p146
      %p148 = scmp.ne.s32.totalorder %s140, %s143
      %p149 = scmp.eq.s32.totalorder %s20, 0
      %p150 = por %p148, %p149
      %p151 = scmp.ne.s32.totalorder %s140, %s143
      %p152 = scmp.eq.s32.totalorder %s25, 1
      %p153 = por %p151, %p152
      %p154 = scmp.ne.s32.totalorder %s143, %s144
      %p155 = scmp.eq.s32.totalorder %s25, 0
      %p156 = por %p154, %p155
      %p157 = scmp.ne.s32.totalorder %s143, %s144
      %p158 = scmp.eq.s32.totalorder %s26, 1
      %p159 = por %p157, %p158
      %p161 = scmp.ne.s32.totalorder %s144, %s160
      %p162 = scmp.eq.s32.totalorder %s26, 0
      %p163 = por %p161, %p162
      %p164 = scmp.le.s32.totalorder 1, %s20
      %p165 = scmp.lt.s32.totalorder %s20, 3
      %p166 = pnand %p164, %p165
      %p167 = pneg %p166
      // Predicated region
      $region9: #{tpu_custom_call.1} parent=5 // pred_check
        _
      $region10: #{tpu_custom_call.1} parent=5 // pred_check_branch
        %169 = sbr.rel (%p166) target = $region12
      $region11: #{tpu_custom_call.1} parent=5 // pred_region
        %s170 = ssub.s32 %s20, 1
        // Predicated region
        $region13: #{tpu_custom_call.1} parent=11 // pred_check
          %p171 = pneg %p67
        $region14: #{tpu_custom_call.1} parent=11 // pred_check_branch
          %173 = sbr.rel (%p171) target = $region16
        $region15: #{tpu_custom_call.1} parent=11 // pred_region
          _
        $region16: #{tpu_custom_call.1} parent=11 // pred_fallthru
          _
        // Predicated region
        $region17: #{tpu_custom_call.1} parent=11 // pred_check
          %p174 = pneg %p88
        $region18: #{tpu_custom_call.1} parent=11 // pred_check_branch
          %176 = sbr.rel (%p174) target = $region20
        $region19: #{tpu_custom_call.1} parent=11 // pred_region
          %s178 = ssub.s32 16, 16
          %179 = vsyncadd [#allocation6], %s178
          %s181 = sshll.u32 %s2, 4
          %s182 = int_to_ptr.vmem [resolvable:$true] %s181
          %184 = dma.vmem_to_smem %s182, 16, [#allocation7], [#allocation6]
        $region20: #{tpu_custom_call.1} parent=11 // pred_fallthru
          _
        // Predicated region
        $region21: #{tpu_custom_call.1} parent=11 // pred_check
          %p185 = pneg %p109
        $region22: #{tpu_custom_call.1} parent=11 // pred_check_branch
          %187 = sbr.rel (%p185) target = $region24
        $region23: #{tpu_custom_call.1} parent=11 // pred_region
          %s189 = ssub.s32 16, 16
          %190 = vsyncadd [#allocation9], %s189
          %s192 = sshll.u32 %s3, 4
          %s193 = int_to_ptr.vmem [resolvable:$true] %s192
          %195 = dma.vmem_to_smem %s193, 16, [#allocation8], [#allocation9]
        $region24: #{tpu_custom_call.1} parent=11 // pred_fallthru
          _
        // Predicated region
        $region25: #{tpu_custom_call.1} parent=11 // pred_check
          %p196 = pneg %p130
        $region26: #{tpu_custom_call.1} parent=11 // pred_check_branch
          %198 = sbr.rel (%p196) target = $region28
        $region27: #{tpu_custom_call.1} parent=11 // pred_region
          _
        $region28: #{tpu_custom_call.1} parent=11 // pred_fallthru
          _
      $region12: #{tpu_custom_call.1} parent=5 // pred_fallthru
        _
      %p199 = scmp.lt.s32.totalorder %s20, 2
      // Predicated region
      $region29: #{tpu_custom_call.1} parent=5 // pred_check
        %p200 = pneg %p199
      $region30: #{tpu_custom_call.1} parent=5 // pred_check_branch
        %202 = sbr.rel (%p200) target = $region32
      $region31: #{tpu_custom_call.1} parent=5 // pred_region
        // Predicated region
        $region33: #{tpu_custom_call.1} parent=31 // pred_check
          %p203 = pneg %p40
        $region34: #{tpu_custom_call.1} parent=31 // pred_check_branch
          %205 = sbr.rel (%p203) target = $region36
        $region35: #{tpu_custom_call.1} parent=31 // pred_region
          %s206 = sand.u32 %s30, 1
          %s207 = scalar_lea.sflag [#allocation4], %s206
          %s208 = sand.u32 %s30, 1
          %s209 = smul.addr %s208, 24
          %s210 = scalar_lea.vmem [#allocation3], %s209
          %s212 = ssub.s32 384, 384
          %213 = vsyncadd %s207, %s212
          %s214 = smul.addr %s20, 128
          %s215 = scalar_lea.hbm %s0, %s214
          %s216 = sshll.u32 %s210, 4
          %s217 = int_to_ptr.vmem [resolvable:$true] %s216
          %222 = dma.hbm_to_vmem [thread:$0]  %s215, 384, %s217, %s207, 256, 128, 8
        $region36: #{tpu_custom_call.1} parent=31 // pred_fallthru
          _
      $region32: #{tpu_custom_call.1} parent=5 // pred_fallthru
        _
      %p223 = scmp.le.s32.totalorder 1, %s20
      %p224 = scmp.lt.s32.totalorder %s20, 3
      %p225 = pnand %p223, %p224
      %p226 = pneg %p225
      // Predicated region
      $region37: #{tpu_custom_call.1} parent=5 // pred_check
        _
      $region38: #{tpu_custom_call.1} parent=5 // pred_check_branch
        %228 = sbr.rel (%p225) target = $region40
      $region39: #{tpu_custom_call.1} parent=5 // pred_region
        %s229 = ssub.s32 %s20, 1
        %s230 = sand.u32 %s33, 1
        %s231 = scalar_lea.sflag [#allocation4], %s230
        %s232 = sand.u32 %s33, 1
        %s233 = smul.addr %s232, 24
        %s234 = scalar_lea.vmem [#allocation3], %s233
        // Predicated region
        $region41: #{tpu_custom_call.1} parent=39 // pred_check
          %p235 = pneg %p46
        $region42: #{tpu_custom_call.1} parent=39 // pred_check_branch
          %237 = sbr.rel (%p235) target = $region44
        $region43: #{tpu_custom_call.1} parent=39 // pred_region
          %238 = dma.done %s231, 384
        $region44: #{tpu_custom_call.1} parent=39 // pred_fallthru
          _
        // Predicated region
        $region45: #{tpu_custom_call.1} parent=39 // pred_check
          %p239 = pneg %p88
        $region46: #{tpu_custom_call.1} parent=39 // pred_check_branch
          %241 = sbr.rel (%p239) target = $region48
        $region47: #{tpu_custom_call.1} parent=39 // pred_region
          %242 = dma.done [#allocation6], 16
        $region48: #{tpu_custom_call.1} parent=39 // pred_fallthru
          _
        // Predicated region
        $region49: #{tpu_custom_call.1} parent=39 // pred_check
          %p243 = pneg %p109
        $region50: #{tpu_custom_call.1} parent=39 // pred_check_branch
          %245 = sbr.rel (%p243) target = $region52
        $region51: #{tpu_custom_call.1} parent=39 // pred_region
          %246 = dma.done [#allocation9], 16
        $region52: #{tpu_custom_call.1} parent=39 // pred_fallthru
          _
        %247 = sfence
        %s248 = sand.u32 %s33, 1
        %s249 = scalar_lea.sflag [#allocation4], %s248
        %s250 = sand.u32 %s33, 1
        %s251 = smul.addr %s250, 24
        %s252 = scalar_lea.vmem [#allocation3], %s251
        %p253 = pneg %p46
        %p254 = pneg %p43
        %p255 = pneg %p67
        %p256 = pneg %p64
        %p257 = pneg %p88
        %p258 = pneg %p85
        %p259 = pneg %p109
        %p260 = pneg %p106
        %p261 = pneg %p130
        %p262 = pneg %p127
        %p263 = pneg %p156
        %p264 = pneg %p153
        %s265 = sand.u32 %s143, 1
        %s266 = scalar_lea.sflag [#allocation5], %s265
        %s267 = sand.u32 %s143, 1
        %s268 = scalar_lea.vmem [#allocation10], %s267
        %v269 = vld [vmem:[%s234] sm:$0xff]
        %v270 = vld [vmem:[%s234 + $0x8] sm:$0xff]
        %v271 = vld [vmem:[%s234 + $0x10] sm:$0xf]
        %v272 = vld [vmem:[%s1] sm:$0xff]
        %v273 = vld [vmem:[%s1 + $0x8] sm:$0x1]
        %s274 = sld [smem:[#allocation7]]
        %v275 = vstv %s274
        %v276 = vmul.f32 %v275, %v269
        %v277 = vmul.f32 %v275, %v270
        %s278 = sld [smem:[#allocation7 + $0x1]]
        %v279 = vstv %s278
        %v280 = vmul.f32 %v279, %v269
        %v281 = vmul.f32 %v279, %v270
        %vm284 = vcmask 1046528
        %v285 = vrot.slane %v280, 1
        %v286 = vrot.slane %v281, 1
        %v287 = vsel %vm284, %v285, %v286
        %v290 = vadd.f32 %v276, %v287
        %v291 = vadd.f32 %v277, %v286
        %s292 = sld [smem:[#allocation7 + $0x2]]
        %v293 = vstv %s292
        %v294 = vmul.f32 %v293, %v270
        %v295 = vmul.f32 %v293, %v271
        %vm298 = vcmask 1045504
        %v299 = vrot.slane %v294, 2
        %v300 = vrot.slane %v295, 2
        %v301 = vsel %vm298, %v299, %v300
        %v304 = vadd.f32 %v290, %v301
        %v305 = vadd.f32 %v291, %v300
        %s306 = sld [smem:[#allocation7 + $0x3]]
        %v307 = vstv %s306
        %v308 = vmul.f32 %v307, %v270
        %v309 = vmul.f32 %v307, %v271
        %vm312 = vcmask 1044480
        %v313 = vrot.slane %v308, 3
        %v314 = vrot.slane %v309, 3
        %v315 = vsel %vm312, %v313, %v314
        %v318 = vadd.f32 %v304, %v315
        %v319 = vadd.f32 %v305, %v314
        %s320 = sld [smem:[#allocation8]]
        %v321 = vstv %s320
        %v322 = vadd.f32 %v318, %v321
        %v323 = vadd.f32 %v319, %v321
        %s324 = sld [smem:[#allocation7 + $0x4]]
        %v325 = vstv %s324
        %v326 = vmul.f32 %v325, %v269
        %v327 = vmul.f32 %v325, %v270
        %s328 = sld [smem:[#allocation7 + $0x5]]
        %v329 = vstv %s328
        %v330 = vmul.f32 %v329, %v269
        %v331 = vmul.f32 %v329, %v270
        %v334 = vrot.slane %v330, 1
        %v335 = vrot.slane %v331, 1
        %v336 = vsel %vm284, %v334, %v335
        %v339 = vadd.f32 %v326, %v336
        %v340 = vadd.f32 %v327, %v335
        %s341 = sld [smem:[#allocation7 + $0x6]]
        %v342 = vstv %s341
        %v343 = vmul.f32 %v342, %v270
        %v344 = vmul.f32 %v342, %v271
        %v347 = vrot.slane %v343, 2
        %v348 = vrot.slane %v344, 2
        %v349 = vsel %vm298, %v347, %v348
        %v352 = vadd.f32 %v339, %v349
        %v353 = vadd.f32 %v340, %v348
        %s354 = sld [smem:[#allocation7 + $0x7]]
        %v355 = vstv %s354
        %v356 = vmul.f32 %v355, %v270
        %v357 = vmul.f32 %v355, %v271
        %v360 = vrot.slane %v356, 3
        %v361 = vrot.slane %v357, 3
        %v362 = vsel %vm312, %v360, %v361
        %v365 = vadd.f32 %v352, %v362
        %v366 = vadd.f32 %v353, %v361
        %s367 = sld [smem:[#allocation8 + $0x1]]
        %v368 = vstv %s367
        %v369 = vadd.f32 %v365, %v368
        %v370 = vadd.f32 %v366, %v368
        %v371 = vmax.f32 %v322, 0.0
        %v372 = vmax.f32 %v323, 0.0
        %374 = vset.pattern.permute.xlu0 0
        %375 = vperm.xlu0 %374, %v272
        %v376 = vpop.permute.xlu0 %375
        %379 = vset.pattern.permute.xlu0 0
        %380 = vperm.xlu0 %379, %v273
        %v381 = vpop.permute.xlu0 %380
        %v383 = vmul.f32 %v371, %v376
        %v384 = vmul.f32 %v372, %v381
        %v385 = vmax.f32 %v369, 0.0
        %v386 = vmax.f32 %v370, 0.0
        %387 = vset.pattern.permute.xlu0 1
        %388 = vperm.xlu0 %387, %v272
        %v389 = vpop.permute.xlu0 %388
        %391 = vset.pattern.permute.xlu0 1
        %392 = vperm.xlu0 %391, %v273
        %v393 = vpop.permute.xlu0 %392
        %v395 = vmul.f32 %v385, %v389
        %v396 = vmul.f32 %v386, %v393
        %v397 = vadd.f32 %v383, %v395
        %v398 = vadd.f32 %v384, %v396
        %vm399 = vcmask 1040384
        %v400 = vsel %vm399, %v398, 0.0
        %v401 = vadd.f32 %v397, %v400
        %v402 = vrot.slane %v401, 4
        %v403 = vadd.f32 %v401, %v402
        %v404 = vrot.slane %v403, 2
        %v405 = vadd.f32 %v403, %v404
        %v406 = vrot.slane %v405, 1
        %v407 = vadd.f32 %v405, %v406
        %s408 = sld [smem:[#allocation2]]
        %v409 = vstv %s408
        %v410 = vadd.f32 %v407, %v409
        %411 = vst [vmem:[%s268] sm:$0x1] %v410
        %s412 = sand.u32 %s143, 1
        %s413 = scalar_lea.sflag [#allocation5], %s412
        %s414 = sand.u32 %s143, 1
        %s415 = scalar_lea.vmem [#allocation10], %s414
        // Predicated region
        $region53: #{tpu_custom_call.1} parent=39 // pred_check
          %p416 = pneg %p153
        $region54: #{tpu_custom_call.1} parent=39 // pred_check_branch
          %418 = sbr.rel (%p416) target = $region56
        $region55: #{tpu_custom_call.1} parent=39 // pred_region
          %s420 = ssub.s32 16, 16
          %421 = vsyncadd %s413, %s420
          %s422 = smul.addr %s25, 16
          %s423 = scalar_lea.hbm %s5, %s422
          %s425 = sshll.u32 %s415, 4
          %s426 = int_to_ptr.vmem [resolvable:$true] %s425
          %428 = dma.vmem_to_hbm [thread:$0]  %s426, 16, %s423, %s413
        $region56: #{tpu_custom_call.1} parent=39 // pred_fallthru
          _
      $region40: #{tpu_custom_call.1} parent=5 // pred_fallthru
        _
      %p429 = scmp.le.s32.totalorder 2, %s20
      // Predicated region
      $region57: #{tpu_custom_call.1} parent=5 // pred_check
        %p430 = pneg %p429
      $region58: #{tpu_custom_call.1} parent=5 // pred_check_branch
        %432 = sbr.rel (%p430) target = $region60
      $region59: #{tpu_custom_call.1} parent=5 // pred_region
        %s433 = ssub.s32 %s20, 2
        // Predicated region
        $region61: #{tpu_custom_call.1} parent=59 // pred_check
          %p434 = pneg %p159
        $region62: #{tpu_custom_call.1} parent=59 // pred_check_branch
          %436 = sbr.rel (%p434) target = $region64
        $region63: #{tpu_custom_call.1} parent=59 // pred_region
          %s437 = sand.u32 %s144, 1
          %s438 = scalar_lea.sflag [#allocation5], %s437
          %s439 = sand.u32 %s144, 1
          %s440 = scalar_lea.vmem [#allocation10], %s439
          %441 = dma.done %s438, 16
        $region64: #{tpu_custom_call.1} parent=59 // pred_fallthru
          _
      $region60: #{tpu_custom_call.1} parent=5 // pred_fallthru
        _
    $region6: #{tpu_custom_call.1} parent=1 // loop_footer
      %s24 = sadd.s32 1, %s20
    $region7: #{tpu_custom_call.1} parent=1 // loop_footer_branch
      %19 = sbr.rel target = $region3
    $region8: #{tpu_custom_call.1} parent=1 // loop_exit
      _
    %442 = vsyncpa [#allocation4], 1
    %s443 = scalar_lea.sflag [#allocation4], 1
    %444 = vsyncpa %s443, 1
    %445 = vsyncpa [#allocation5], 1
    %s446 = scalar_lea.sflag [#allocation5], 1
    %447 = vsyncpa %s446, 1
    %448 = vsyncpa [#allocation6], 1
    %s449 = scalar_lea.sflag [#allocation6], 1
    %450 = vsyncpa %s449, 1
    %451 = vsyncpa [#allocation9], 1

</llo_original>
